<compile_context>
chip_gen: v6e
topology: v6e:2x2x1
jax: 0.10.0
libtpu: 0.0.40
codegen_flags: <defaults>
</compile_context>

<pallas_src>
import functools

import jax
import jax.numpy as jnp
from jax.experimental import pallas as pl
from jax.experimental.pallas import tpu as pltpu


def _cond_lstm_kernel(x0_ref, vflat_ref, wxe_ref, be_ref, wih_ref, whh_ref,
                      b_ref, wfc_ref, bfc_ref, out_ref, *, batch, seq_len):
    B, T = batch, seq_len
    H = whh_ref.shape[0]

    # Hoist all weight/bias loads out of the recurrence.
    wxe = wxe_ref[...]
    be = be_ref[...]
    wih = wih_ref[...]
    whh = whh_ref[...]
    b_lstm = b_ref[...]
    wfc = wfc_ref[...]
    bfc = bfc_ref[...]

    # Encoder: tanh(x_0 @ W_enc + b_enc) initializes h; cell state starts at 0.
    h = jnp.tanh(jnp.dot(x0_ref[...], wxe,
                         preferred_element_type=jnp.float32) + be)
    c = jnp.zeros_like(h)

    # Hoisted, time-independent input projection: one MXU matmul for all steps.
    # vflat is time-major: row t*B + b == V[b, t, :].
    gates_x = jnp.dot(vflat_ref[...], wih,
                      preferred_element_type=jnp.float32) + b_lstm   # (T*B, 4H)

    hs = []
    for t in range(T):  # fully unrolled: T is small and static
        # Only the recurrent matmul sits on the serial critical path.
        gates = gates_x[t * B:(t + 1) * B, :] + jnp.dot(
            h, whh, preferred_element_type=jnp.float32)              # (B, 4H)
        # NOTE: gate slices cut the 4H lane dim at H boundaries; minor at H=32.
        i_g = jax.nn.sigmoid(gates[:, 0 * H:1 * H])
        f_g = jax.nn.sigmoid(gates[:, 1 * H:2 * H])
        g_g = jnp.tanh(gates[:, 2 * H:3 * H])
        o_g = jax.nn.sigmoid(gates[:, 3 * H:4 * H])
        c = f_g * c + i_g * g_g
        h = o_g * jnp.tanh(c)
        hs.append(h)

    # Batched fc projection (off the recurrent critical path) + single store.
    hs_all = jnp.concatenate(hs, axis=0)                             # (T*B, H)
    y = jnp.dot(hs_all, wfc, preferred_element_type=jnp.float32) + bfc
    out_ref[...] = y.astype(out_ref.dtype)


def conditional_lstm_forward(x0, V, params):
    """x0: (B, Dx), V: (B, T, Dv) -> (B, T, Dout)"""
    B, Dx = x0.shape
    _, T, Dv = V.shape
    wxe, be, wih, whh, b_lstm, wfc, bfc = params
    Dout = wfc.shape[1]

    # Wrapper-side layout plumbing: time-major flatten (row t*B + b == V[b,t]).
    v_flat = jnp.transpose(V, (1, 0, 2)).reshape(T * B, Dv)

    kernel = functools.partial(_cond_lstm_kernel, batch=B, seq_len=T)
    vmem_spec = lambda: pl.BlockSpec(memory_space=pltpu.MemorySpace.VMEM)

    # Single kernel invocation (no grid): everything resident in VMEM.
    y_flat = pl.pallas_call(
        kernel,
        out_shape=jax.ShapeDtypeStruct((T * B, Dout), jnp.float32),
        in_specs=[vmem_spec() for _ in range(9)],
        out_specs=vmem_spec(),
    )(x0, v_flat, wxe, be, wih, whh, b_lstm, wfc, bfc)

    # Restore (B, T, Dout).
    return jnp.transpose(y_flat.reshape(T, B, Dout), (1, 0, 2))


def init_params(key, hidden_size, input_size_x=2, input_size_v=2, output_size=2):
    """Deterministic synthetic parameters (same shapes as the PyTorch module)."""
    ks = jax.random.split(key, 7)
    H = hidden_size
    scale = 0.1
    wxe = scale * jax.random.normal(ks[0], (input_size_x, H), jnp.float32)
    be = scale * jax.random.normal(ks[1], (1, H), jnp.float32)
    # PyTorch LSTM: weight_ih (4H, Dv), weight_hh (4H, H), biases (4H,)
    # stored transposed here; the two biases are pre-summed.
    wih = scale * jax.random.normal(ks[2], (input_size_v, 4 * H), jnp.float32)
    whh = scale * jax.random.normal(ks[3], (H, 4 * H), jnp.float32)
    b_lstm = scale * jax.random.normal(ks[4], (1, 4 * H), jnp.float32)
    wfc = scale * jax.random.normal(ks[5], (H, output_size), jnp.float32)
    bfc = scale * jax.random.normal(ks[6], (1, output_size), jnp.float32)
    return (wxe, be, wih, whh, b_lstm, wfc, bfc)


def reference_forward(x0, V, params):
    """Pure-JAX reference mirroring the PyTorch semantics (for sanity check)."""
    wxe, be, wih, whh, b_lstm, wfc, bfc = params
    H = wxe.shape[1]
    h = jnp.tanh(x0 @ wxe + be)
    c = jnp.zeros_like(h)
    outs = []
    for t in range(V.shape[1]):
        gates = V[:, t, :] @ wih + h @ whh + b_lstm
        i = jax.nn.sigmoid(gates[:, 0 * H:1 * H])
        f = jax.nn.sigmoid(gates[:, 1 * H:2 * H])
        g = jnp.tanh(gates[:, 2 * H:3 * H])
        o = jax.nn.sigmoid(gates[:, 3 * H:4 * H])
        c = f * c + i * g
        h = o * jnp.tanh(c)
        outs.append(h @ wfc + bfc)
    return jnp.stack(outs, axis=1)


if __name__ == "__main__":
    B, T, H = 2, 8, 32
    Dx, Dv, Dout = 2, 2, 2

    key = jax.random.PRNGKey(0)
    k_x, k_v, k_p = jax.random.split(key, 3)
    x0 = jax.random.normal(k_x, (B, Dx), jnp.float32)
    V = jax.random.normal(k_v, (B, T, Dv), jnp.float32)
    params = init_params(k_p, H, Dx, Dv, Dout)

    out = conditional_lstm_forward(x0, V, params)
    out = jax.block_until_ready(out)

    ref = reference_forward(x0, V, params)
    assert out.shape == (B, T, Dout)
    assert jnp.allclose(out, ref, atol=1e-5, rtol=1e-5)

    print("KERNEL_OK")
</pallas_src>

<mosaic_0001>
module attributes {stable_mosaic.version = 11 : i64} {
  func.func @_cond_lstm_kernel(%arg0: memref<2x2xf32, #tpu.memory_space<vmem>>, %arg1: memref<16x2xf32, #tpu.memory_space<vmem>>, %arg2: memref<2x32xf32, #tpu.memory_space<vmem>>, %arg3: memref<1x32xf32, #tpu.memory_space<vmem>>, %arg4: memref<2x128xf32, #tpu.memory_space<vmem>>, %arg5: memref<32x128xf32, #tpu.memory_space<vmem>>, %arg6: memref<1x128xf32, #tpu.memory_space<vmem>>, %arg7: memref<32x2xf32, #tpu.memory_space<vmem>>, %arg8: memref<1x2xf32, #tpu.memory_space<vmem>>, %arg9: memref<16x2xf32, #tpu.memory_space<vmem>>) attributes {dimension_semantics = [], scalar_prefetch = 0 : i64, scratch_operands = 0 : i64, tpu.core_type = #tpu.core_type<tc>} {
    %c0 = arith.constant 0 : index
    %c0_0 = arith.constant 0 : index
    %0 = vector.load %arg2[%c0, %c0_0] : memref<2x32xf32, #tpu.memory_space<vmem>>, vector<2x32xf32>
    %c0_1 = arith.constant 0 : index
    %c0_2 = arith.constant 0 : index
    %1 = vector.load %arg3[%c0_1, %c0_2] : memref<1x32xf32, #tpu.memory_space<vmem>>, vector<1x32xf32>
    %c0_3 = arith.constant 0 : index
    %c0_4 = arith.constant 0 : index
    %2 = vector.load %arg4[%c0_3, %c0_4] : memref<2x128xf32, #tpu.memory_space<vmem>>, vector<2x128xf32>
    %c0_5 = arith.constant 0 : index
    %c0_6 = arith.constant 0 : index
    %3 = vector.load %arg5[%c0_5, %c0_6] : memref<32x128xf32, #tpu.memory_space<vmem>>, vector<32x128xf32>
    %c0_7 = arith.constant 0 : index
    %c0_8 = arith.constant 0 : index
    %4 = vector.load %arg6[%c0_7, %c0_8] : memref<1x128xf32, #tpu.memory_space<vmem>>, vector<1x128xf32>
    %c0_9 = arith.constant 0 : index
    %c0_10 = arith.constant 0 : index
    %5 = vector.load %arg7[%c0_9, %c0_10] : memref<32x2xf32, #tpu.memory_space<vmem>>, vector<32x2xf32>
    %c0_11 = arith.constant 0 : index
    %c0_12 = arith.constant 0 : index
    %6 = vector.load %arg8[%c0_11, %c0_12] : memref<1x2xf32, #tpu.memory_space<vmem>>, vector<1x2xf32>
    %c0_13 = arith.constant 0 : index
    %c0_14 = arith.constant 0 : index
    %7 = vector.load %arg0[%c0_13, %c0_14] : memref<2x2xf32, #tpu.memory_space<vmem>>, vector<2x2xf32>
    %cst = arith.constant dense<0.000000e+00> : vector<2x32xf32>
    %8 = tpu.matmul %7, %0, %cst {dimension_numbers = #tpu.dot_dimension_numbers<[1], [0], [0], [1], [0, 0, 1, 1], [], []>} : vector<2x2xf32>, vector<2x32xf32>, vector<2x32xf32> -> vector<2x32xf32>
    %9 = vector.broadcast %1 : vector<1x32xf32> to vector<2x32xf32>
    %10 = arith.addf %8, %9 : vector<2x32xf32>
    %11 = math.tanh %10 : vector<2x32xf32>
    %cst_15 = arith.constant 0.000000e+00 : f32
    %12 = vector.broadcast %cst_15 : f32 to vector<2x32xf32>
    %c0_16 = arith.constant 0 : index
    %c0_17 = arith.constant 0 : index
    %13 = vector.load %arg1[%c0_16, %c0_17] : memref<16x2xf32, #tpu.memory_space<vmem>>, vector<16x2xf32>
    %cst_18 = arith.constant dense<0.000000e+00> : vector<16x128xf32>
    %14 = tpu.matmul %13, %2, %cst_18 {dimension_numbers = #tpu.dot_dimension_numbers<[1], [0], [0], [1], [0, 0, 1, 1], [], []>} : vector<16x2xf32>, vector<2x128xf32>, vector<16x128xf32> -> vector<16x128xf32>
    %15 = vector.broadcast %4 : vector<1x128xf32> to vector<16x128xf32>
    %16 = arith.addf %14, %15 : vector<16x128xf32>
    %17 = vector.extract_strided_slice %16 {offsets = [0, 0], sizes = [2, 128], strides = [1, 1]} : vector<16x128xf32> to vector<2x128xf32>
    %cst_19 = arith.constant dense<0.000000e+00> : vector<2x128xf32>
    %18 = tpu.matmul %11, %3, %cst_19 {dimension_numbers = #tpu.dot_dimension_numbers<[1], [0], [0], [1], [0, 0, 1, 1], [], []>} : vector<2x32xf32>, vector<32x128xf32>, vector<2x128xf32> -> vector<2x128xf32>
    %19 = arith.addf %17, %18 : vector<2x128xf32>
    %20 = vector.extract_strided_slice %19 {offsets = [0, 0], sizes = [2, 32], strides = [1, 1]} : vector<2x128xf32> to vector<2x32xf32>
    %21 = arith.negf %20 : vector<2x32xf32>
    %22 = math.exp %21 : vector<2x32xf32>
    %cst_20 = arith.constant 1.000000e+00 : f32
    %23 = vector.broadcast %cst_20 : f32 to vector<2x32xf32>
    %24 = arith.addf %23, %22 : vector<2x32xf32>
    %25 = arith.divf %23, %24 : vector<2x32xf32>
    %26 = vector.extract_strided_slice %19 {offsets = [0, 32], sizes = [2, 32], strides = [1, 1]} : vector<2x128xf32> to vector<2x32xf32>
    %27 = arith.negf %26 : vector<2x32xf32>
    %28 = math.exp %27 : vector<2x32xf32>
    %cst_21 = arith.constant 1.000000e+00 : f32
    %29 = vector.broadcast %cst_21 : f32 to vector<2x32xf32>
    %30 = arith.addf %29, %28 : vector<2x32xf32>
    %31 = arith.divf %29, %30 : vector<2x32xf32>
    %32 = vector.extract_strided_slice %19 {offsets = [0, 64], sizes = [2, 32], strides = [1, 1]} : vector<2x128xf32> to vector<2x32xf32>
    %33 = math.tanh %32 : vector<2x32xf32>
    %34 = vector.extract_strided_slice %19 {offsets = [0, 96], sizes = [2, 32], strides = [1, 1]} : vector<2x128xf32> to vector<2x32xf32>
    %35 = arith.negf %34 : vector<2x32xf32>
    %36 = math.exp %35 : vector<2x32xf32>
    %cst_22 = arith.constant 1.000000e+00 : f32
    %37 = vector.broadcast %cst_22 : f32 to vector<2x32xf32>
    %38 = arith.addf %37, %36 : vector<2x32xf32>
    %39 = arith.divf %37, %38 : vector<2x32xf32>
    %40 = arith.mulf %31, %12 : vector<2x32xf32>
    %41 = arith.mulf %25, %33 : vector<2x32xf32>
    %42 = arith.addf %40, %41 : vector<2x32xf32>
    %43 = math.tanh %42 : vector<2x32xf32>
    %44 = arith.mulf %39, %43 : vector<2x32xf32>
    %45 = vector.extract_strided_slice %16 {offsets = [2, 0], sizes = [2, 128], strides = [1, 1]} : vector<16x128xf32> to vector<2x128xf32>
    %cst_23 = arith.constant dense<0.000000e+00> : vector<2x128xf32>
    %46 = tpu.matmul %44, %3, %cst_23 {dimension_numbers = #tpu.dot_dimension_numbers<[1], [0], [0], [1], [0, 0, 1, 1], [], []>} : vector<2x32xf32>, vector<32x128xf32>, vector<2x128xf32> -> vector<2x128xf32>
    %47 = arith.addf %45, %46 : vector<2x128xf32>
    %48 = vector.extract_strided_slice %47 {offsets = [0, 0], sizes = [2, 32], strides = [1, 1]} : vector<2x128xf32> to vector<2x32xf32>
    %49 = arith.negf %48 : vector<2x32xf32>
    %50 = math.exp %49 : vector<2x32xf32>
    %cst_24 = arith.constant 1.000000e+00 : f32
    %51 = vector.broadcast %cst_24 : f32 to vector<2x32xf32>
    %52 = arith.addf %51, %50 : vector<2x32xf32>
    %53 = arith.divf %51, %52 : vector<2x32xf32>
    %54 = vector.extract_strided_slice %47 {offsets = [0, 32], sizes = [2, 32], strides = [1, 1]} : vector<2x128xf32> to vector<2x32xf32>
    %55 = arith.negf %54 : vector<2x32xf32>
    %56 = math.exp %55 : vector<2x32xf32>
    %cst_25 = arith.constant 1.000000e+00 : f32
    %57 = vector.broadcast %cst_25 : f32 to vector<2x32xf32>
    %58 = arith.addf %57, %56 : vector<2x32xf32>
    %59 = arith.divf %57, %58 : vector<2x32xf32>
    %60 = vector.extract_strided_slice %47 {offsets = [0, 64], sizes = [2, 32], strides = [1, 1]} : vector<2x128xf32> to vector<2x32xf32>
    %61 = math.tanh %60 : vector<2x32xf32>
    %62 = vector.extract_strided_slice %47 {offsets = [0, 96], sizes = [2, 32], strides = [1, 1]} : vector<2x128xf32> to vector<2x32xf32>
    %63 = arith.negf %62 : vector<2x32xf32>
    %64 = math.exp %63 : vector<2x32xf32>
    %cst_26 = arith.constant 1.000000e+00 : f32
    %65 = vector.broadcast %cst_26 : f32 to vector<2x32xf32>
    %66 = arith.addf %65, %64 : vector<2x32xf32>
    %67 = arith.divf %65, %66 : vector<2x32xf32>
    %68 = arith.mulf %59, %42 : vector<2x32xf32>
    %69 = arith.mulf %53, %61 : vector<2x32xf32>
    %70 = arith.addf %68, %69 : vector<2x32xf32>
    %71 = math.tanh %70 : vector<2x32xf32>
    %72 = arith.mulf %67, %71 : vector<2x32xf32>
    %73 = vector.extract_strided_slice %16 {offsets = [4, 0], sizes = [2, 128], strides = [1, 1]} : vector<16x128xf32> to vector<2x128xf32>
    %cst_27 = arith.constant dense<0.000000e+00> : vector<2x128xf32>
    %74 = tpu.matmul %72, %3, %cst_27 {dimension_numbers = #tpu.dot_dimension_numbers<[1], [0], [0], [1], [0, 0, 1, 1], [], []>} : vector<2x32xf32>, vector<32x128xf32>, vector<2x128xf32> -> vector<2x128xf32>
    %75 = arith.addf %73, %74 : vector<2x128xf32>
    %76 = vector.extract_strided_slice %75 {offsets = [0, 0], sizes = [2, 32], strides = [1, 1]} : vector<2x128xf32> to vector<2x32xf32>
    %77 = arith.negf %76 : vector<2x32xf32>
    %78 = math.exp %77 : vector<2x32xf32>
    %cst_28 = arith.constant 1.000000e+00 : f32
    %79 = vector.broadcast %cst_28 : f32 to vector<2x32xf32>
    %80 = arith.addf %79, %78 : vector<2x32xf32>
    %81 = arith.divf %79, %80 : vector<2x32xf32>
    %82 = vector.extract_strided_slice %75 {offsets = [0, 32], sizes = [2, 32], strides = [1, 1]} : vector<2x128xf32> to vector<2x32xf32>
    %83 = arith.negf %82 : vector<2x32xf32>
    %84 = math.exp %83 : vector<2x32xf32>
    %cst_29 = arith.constant 1.000000e+00 : f32
    %85 = vector.broadcast %cst_29 : f32 to vector<2x32xf32>
    %86 = arith.addf %85, %84 : vector<2x32xf32>
    %87 = arith.divf %85, %86 : vector<2x32xf32>
    %88 = vector.extract_strided_slice %75 {offsets = [0, 64], sizes = [2, 32], strides = [1, 1]} : vector<2x128xf32> to vector<2x32xf32>
    %89 = math.tanh %88 : vector<2x32xf32>
    %90 = vector.extract_strided_slice %75 {offsets = [0, 96], sizes = [2, 32], strides = [1, 1]} : vector<2x128xf32> to vector<2x32xf32>
    %91 = arith.negf %90 : vector<2x32xf32>
    %92 = math.exp %91 : vector<2x32xf32>
    %cst_30 = arith.constant 1.000000e+00 : f32
    %93 = vector.broadcast %cst_30 : f32 to vector<2x32xf32>
    %94 = arith.addf %93, %92 : vector<2x32xf32>
    %95 = arith.divf %93, %94 : vector<2x32xf32>
    %96 = arith.mulf %87, %70 : vector<2x32xf32>
    %97 = arith.mulf %81, %89 : vector<2x32xf32>
    %98 = arith.addf %96, %97 : vector<2x32xf32>
    %99 = math.tanh %98 : vector<2x32xf32>
    %100 = arith.mulf %95, %99 : vector<2x32xf32>
    %101 = vector.extract_strided_slice %16 {offsets = [6, 0], sizes = [2, 128], strides = [1, 1]} : vector<16x128xf32> to vector<2x128xf32>
    %cst_31 = arith.constant dense<0.000000e+00> : vector<2x128xf32>
    %102 = tpu.matmul %100, %3, %cst_31 {dimension_numbers = #tpu.dot_dimension_numbers<[1], [0], [0], [1], [0, 0, 1, 1], [], []>} : vector<2x32xf32>, vector<32x128xf32>, vector<2x128xf32> -> vector<2x128xf32>
    %103 = arith.addf %101, %102 : vector<2x128xf32>
    %104 = vector.extract_strided_slice %103 {offsets = [0, 0], sizes = [2, 32], strides = [1, 1]} : vector<2x128xf32> to vector<2x32xf32>
    %105 = arith.negf %104 : vector<2x32xf32>
    %106 = math.exp %105 : vector<2x32xf32>
    %cst_32 = arith.constant 1.000000e+00 : f32
    %107 = vector.broadcast %cst_32 : f32 to vector<2x32xf32>
    %108 = arith.addf %107, %106 : vector<2x32xf32>
    %109 = arith.divf %107, %108 : vector<2x32xf32>
    %110 = vector.extract_strided_slice %103 {offsets = [0, 32], sizes = [2, 32], strides = [1, 1]} : vector<2x128xf32> to vector<2x32xf32>
    %111 = arith.negf %110 : vector<2x32xf32>
    %112 = math.exp %111 : vector<2x32xf32>
    %cst_33 = arith.constant 1.000000e+00 : f32
    %113 = vector.broadcast %cst_33 : f32 to vector<2x32xf32>
    %114 = arith.addf %113, %112 : vector<2x32xf32>
    %115 = arith.divf %113, %114 : vector<2x32xf32>
    %116 = vector.extract_strided_slice %103 {offsets = [0, 64], sizes = [2, 32], strides = [1, 1]} : vector<2x128xf32> to vector<2x32xf32>
    %117 = math.tanh %116 : vector<2x32xf32>
    %118 = vector.extract_strided_slice %103 {offsets = [0, 96], sizes = [2, 32], strides = [1, 1]} : vector<2x128xf32> to vector<2x32xf32>
    %119 = arith.negf %118 : vector<2x32xf32>
    %120 = math.exp %119 : vector<2x32xf32>
    %cst_34 = arith.constant 1.000000e+00 : f32
    %121 = vector.broadcast %cst_34 : f32 to vector<2x32xf32>
    %122 = arith.addf %121, %120 : vector<2x32xf32>
    %123 = arith.divf %121, %122 : vector<2x32xf32>
    %124 = arith.mulf %115, %98 : vector<2x32xf32>
    %125 = arith.mulf %109, %117 : vector<2x32xf32>
    %126 = arith.addf %124, %125 : vector<2x32xf32>
    %127 = math.tanh %126 : vector<2x32xf32>
    %128 = arith.mulf %123, %127 : vector<2x32xf32>
    %129 = vector.extract_strided_slice %16 {offsets = [8, 0], sizes = [2, 128], strides = [1, 1]} : vector<16x128xf32> to vector<2x128xf32>
    %cst_35 = arith.constant dense<0.000000e+00> : vector<2x128xf32>
    %130 = tpu.matmul %128, %3, %cst_35 {dimension_numbers = #tpu.dot_dimension_numbers<[1], [0], [0], [1], [0, 0, 1, 1], [], []>} : vector<2x32xf32>, vector<32x128xf32>, vector<2x128xf32> -> vector<2x128xf32>
    %131 = arith.addf %129, %130 : vector<2x128xf32>
    %132 = vector.extract_strided_slice %131 {offsets = [0, 0], sizes = [2, 32], strides = [1, 1]} : vector<2x128xf32> to vector<2x32xf32>
    %133 = arith.negf %132 : vector<2x32xf32>
    %134 = math.exp %133 : vector<2x32xf32>
    %cst_36 = arith.constant 1.000000e+00 : f32
    %135 = vector.broadcast %cst_36 : f32 to vector<2x32xf32>
    %136 = arith.addf %135, %134 : vector<2x32xf32>
    %137 = arith.divf %135, %136 : vector<2x32xf32>
    %138 = vector.extract_strided_slice %131 {offsets = [0, 32], sizes = [2, 32], strides = [1, 1]} : vector<2x128xf32> to vector<2x32xf32>
    %139 = arith.negf %138 : vector<2x32xf32>
    %140 = math.exp %139 : vector<2x32xf32>
    %cst_37 = arith.constant 1.000000e+00 : f32
    %141 = vector.broadcast %cst_37 : f32 to vector<2x32xf32>
    %142 = arith.addf %141, %140 : vector<2x32xf32>
    %143 = arith.divf %141, %142 : vector<2x32xf32>
    %144 = vector.extract_strided_slice %131 {offsets = [0, 64], sizes = [2, 32], strides = [1, 1]} : vector<2x128xf32> to vector<2x32xf32>
    %145 = math.tanh %144 : vector<2x32xf32>
    %146 = vector.extract_strided_slice %131 {offsets = [0, 96], sizes = [2, 32], strides = [1, 1]} : vector<2x128xf32> to vector<2x32xf32>
    %147 = arith.negf %146 : vector<2x32xf32>
    %148 = math.exp %147 : vector<2x32xf32>
    %cst_38 = arith.constant 1.000000e+00 : f32
    %149 = vector.broadcast %cst_38 : f32 to vector<2x32xf32>
    %150 = arith.addf %149, %148 : vector<2x32xf32>
    %151 = arith.divf %149, %150 : vector<2x32xf32>
    %152 = arith.mulf %143, %126 : vector<2x32xf32>
    %153 = arith.mulf %137, %145 : vector<2x32xf32>
    %154 = arith.addf %152, %153 : vector<2x32xf32>
    %155 = math.tanh %154 : vector<2x32xf32>
    %156 = arith.mulf %151, %155 : vector<2x32xf32>
    %157 = vector.extract_strided_slice %16 {offsets = [10, 0], sizes = [2, 128], strides = [1, 1]} : vector<16x128xf32> to vector<2x128xf32>
    %cst_39 = arith.constant dense<0.000000e+00> : vector<2x128xf32>
    %158 = tpu.matmul %156, %3, %cst_39 {dimension_numbers = #tpu.dot_dimension_numbers<[1], [0], [0], [1], [0, 0, 1, 1], [], []>} : vector<2x32xf32>, vector<32x128xf32>, vector<2x128xf32> -> vector<2x128xf32>
    %159 = arith.addf %157, %158 : vector<2x128xf32>
    %160 = vector.extract_strided_slice %159 {offsets = [0, 0], sizes = [2, 32], strides = [1, 1]} : vector<2x128xf32> to vector<2x32xf32>
    %161 = arith.negf %160 : vector<2x32xf32>
    %162 = math.exp %161 : vector<2x32xf32>
    %cst_40 = arith.constant 1.000000e+00 : f32
    %163 = vector.broadcast %cst_40 : f32 to vector<2x32xf32>
    %164 = arith.addf %163, %162 : vector<2x32xf32>
    %165 = arith.divf %163, %164 : vector<2x32xf32>
    %166 = vector.extract_strided_slice %159 {offsets = [0, 32], sizes = [2, 32], strides = [1, 1]} : vector<2x128xf32> to vector<2x32xf32>
    %167 = arith.negf %166 : vector<2x32xf32>
    %168 = math.exp %167 : vector<2x32xf32>
    %cst_41 = arith.constant 1.000000e+00 : f32
    %169 = vector.broadcast %cst_41 : f32 to vector<2x32xf32>
    %170 = arith.addf %169, %168 : vector<2x32xf32>
    %171 = arith.divf %169, %170 : vector<2x32xf32>
    %172 = vector.extract_strided_slice %159 {offsets = [0, 64], sizes = [2, 32], strides = [1, 1]} : vector<2x128xf32> to vector<2x32xf32>
    %173 = math.tanh %172 : vector<2x32xf32>
    %174 = vector.extract_strided_slice %159 {offsets = [0, 96], sizes = [2, 32], strides = [1, 1]} : vector<2x128xf32> to vector<2x32xf32>
    %175 = arith.negf %174 : vector<2x32xf32>
    %176 = math.exp %175 : vector<2x32xf32>
    %cst_42 = arith.constant 1.000000e+00 : f32
    %177 = vector.broadcast %cst_42 : f32 to vector<2x32xf32>
    %178 = arith.addf %177, %176 : vector<2x32xf32>
    %179 = arith.divf %177, %178 : vector<2x32xf32>
    %180 = arith.mulf %171, %154 : vector<2x32xf32>
    %181 = arith.mulf %165, %173 : vector<2x32xf32>
    %182 = arith.addf %180, %181 : vector<2x32xf32>
    %183 = math.tanh %182 : vector<2x32xf32>
    %184 = arith.mulf %179, %183 : vector<2x32xf32>
    %185 = vector.extract_strided_slice %16 {offsets = [12, 0], sizes = [2, 128], strides = [1, 1]} : vector<16x128xf32> to vector<2x128xf32>
    %cst_43 = arith.constant dense<0.000000e+00> : vector<2x128xf32>
    %186 = tpu.matmul %184, %3, %cst_43 {dimension_numbers = #tpu.dot_dimension_numbers<[1], [0], [0], [1], [0, 0, 1, 1], [], []>} : vector<2x32xf32>, vector<32x128xf32>, vector<2x128xf32> -> vector<2x128xf32>
    %187 = arith.addf %185, %186 : vector<2x128xf32>
    %188 = vector.extract_strided_slice %187 {offsets = [0, 0], sizes = [2, 32], strides = [1, 1]} : vector<2x128xf32> to vector<2x32xf32>
    %189 = arith.negf %188 : vector<2x32xf32>
    %190 = math.exp %189 : vector<2x32xf32>
    %cst_44 = arith.constant 1.000000e+00 : f32
    %191 = vector.broadcast %cst_44 : f32 to vector<2x32xf32>
    %192 = arith.addf %191, %190 : vector<2x32xf32>
    %193 = arith.divf %191, %192 : vector<2x32xf32>
    %194 = vector.extract_strided_slice %187 {offsets = [0, 32], sizes = [2, 32], strides = [1, 1]} : vector<2x128xf32> to vector<2x32xf32>
    %195 = arith.negf %194 : vector<2x32xf32>
    %196 = math.exp %195 : vector<2x32xf32>
    %cst_45 = arith.constant 1.000000e+00 : f32
    %197 = vector.broadcast %cst_45 : f32 to vector<2x32xf32>
    %198 = arith.addf %197, %196 : vector<2x32xf32>
    %199 = arith.divf %197, %198 : vector<2x32xf32>
    %200 = vector.extract_strided_slice %187 {offsets = [0, 64], sizes = [2, 32], strides = [1, 1]} : vector<2x128xf32> to vector<2x32xf32>
    %201 = math.tanh %200 : vector<2x32xf32>
    %202 = vector.extract_strided_slice %187 {offsets = [0, 96], sizes = [2, 32], strides = [1, 1]} : vector<2x128xf32> to vector<2x32xf32>
    %203 = arith.negf %202 : vector<2x32xf32>
    %204 = math.exp %203 : vector<2x32xf32>
    %cst_46 = arith.constant 1.000000e+00 : f32
    %205 = vector.broadcast %cst_46 : f32 to vector<2x32xf32>
    %206 = arith.addf %205, %204 : vector<2x32xf32>
    %207 = arith.divf %205, %206 : vector<2x32xf32>
    %208 = arith.mulf %199, %182 : vector<2x32xf32>
    %209 = arith.mulf %193, %201 : vector<2x32xf32>
    %210 = arith.addf %208, %209 : vector<2x32xf32>
    %211 = math.tanh %210 : vector<2x32xf32>
    %212 = arith.mulf %207, %211 : vector<2x32xf32>
    %213 = vector.extract_strided_slice %16 {offsets = [14, 0], sizes = [2, 128], strides = [1, 1]} : vector<16x128xf32> to vector<2x128xf32>
    %cst_47 = arith.constant dense<0.000000e+00> : vector<2x128xf32>
    %214 = tpu.matmul %212, %3, %cst_47 {dimension_numbers = #tpu.dot_dimension_numbers<[1], [0], [0], [1], [0, 0, 1, 1], [], []>} : vector<2x32xf32>, vector<32x128xf32>, vector<2x128xf32> -> vector<2x128xf32>
    %215 = arith.addf %213, %214 : vector<2x128xf32>
    %216 = vector.extract_strided_slice %215 {offsets = [0, 0], sizes = [2, 32], strides = [1, 1]} : vector<2x128xf32> to vector<2x32xf32>
    %217 = arith.negf %216 : vector<2x32xf32>
    %218 = math.exp %217 : vector<2x32xf32>
    %cst_48 = arith.constant 1.000000e+00 : f32
    %219 = vector.broadcast %cst_48 : f32 to vector<2x32xf32>
    %220 = arith.addf %219, %218 : vector<2x32xf32>
    %221 = arith.divf %219, %220 : vector<2x32xf32>
    %222 = vector.extract_strided_slice %215 {offsets = [0, 32], sizes = [2, 32], strides = [1, 1]} : vector<2x128xf32> to vector<2x32xf32>
    %223 = arith.negf %222 : vector<2x32xf32>
    %224 = math.exp %223 : vector<2x32xf32>
    %cst_49 = arith.constant 1.000000e+00 : f32
    %225 = vector.broadcast %cst_49 : f32 to vector<2x32xf32>
    %226 = arith.addf %225, %224 : vector<2x32xf32>
    %227 = arith.divf %225, %226 : vector<2x32xf32>
    %228 = vector.extract_strided_slice %215 {offsets = [0, 64], sizes = [2, 32], strides = [1, 1]} : vector<2x128xf32> to vector<2x32xf32>
    %229 = math.tanh %228 : vector<2x32xf32>
    %230 = vector.extract_strided_slice %215 {offsets = [0, 96], sizes = [2, 32], strides = [1, 1]} : vector<2x128xf32> to vector<2x32xf32>
    %231 = arith.negf %230 : vector<2x32xf32>
    %232 = math.exp %231 : vector<2x32xf32>
    %cst_50 = arith.constant 1.000000e+00 : f32
    %233 = vector.broadcast %cst_50 : f32 to vector<2x32xf32>
    %234 = arith.addf %233, %232 : vector<2x32xf32>
    %235 = arith.divf %233, %234 : vector<2x32xf32>
    %236 = arith.mulf %227, %210 : vector<2x32xf32>
    %237 = arith.mulf %221, %229 : vector<2x32xf32>
    %238 = arith.addf %236, %237 : vector<2x32xf32>
    %239 = math.tanh %238 : vector<2x32xf32>
    %240 = arith.mulf %235, %239 : vector<2x32xf32>
    %241 = tpu.concatenate %44, %72, %100, %128, %156, %184, %212, %240 in 0 : vector<2x32xf32>, vector<2x32xf32>, vector<2x32xf32>, vector<2x32xf32>, vector<2x32xf32>, vector<2x32xf32>, vector<2x32xf32>, vector<2x32xf32> -> vector<16x32xf32>
    %cst_51 = arith.constant dense<0.000000e+00> : vector<16x2xf32>
    %242 = tpu.matmul %241, %5, %cst_51 {dimension_numbers = #tpu.dot_dimension_numbers<[1], [0], [0], [1], [0, 0, 1, 1], [], []>} : vector<16x32xf32>, vector<32x2xf32>, vector<16x2xf32> -> vector<16x2xf32>
    %243 = vector.broadcast %6 : vector<1x2xf32> to vector<16x2xf32>
    %244 = arith.addf %242, %243 : vector<16x2xf32>
    %c0_52 = arith.constant 0 : index
    %c0_53 = arith.constant 0 : index
    %245 = vector.load %arg9[%c0_52, %c0_53] : memref<16x2xf32, #tpu.memory_space<vmem>>, vector<16x2xf32>
    tpu.vector_store %arg9[%c0_52, %c0_53], %244 {strides = array<i32>} : memref<16x2xf32, #tpu.memory_space<vmem>>, vector<16x2xf32>,
    return
  }
}

</mosaic_0001>

<llo_original>
// kernel: tpu_custom_call.1
$region0: #{tpu_custom_call.1}
  #allocation0 [shape = 'u32[]', space=smem, size = 0x4, offset = 0x4, fixed_abs, tag = 'smem constant byte address 0x4 - core index']
  #allocation1 [shape = 'u32[144,128]{1,0:T(1,128)}', space=vmem, size = 0x12000, scoped, tag = 'internal scratch']
  %s0 = inlined_call_operand.vmem [shape: f32[2,2], index: 0, kind: input, shape index: {}]
  %s1 = inlined_call_operand.vmem [shape: f32[16,2], index: 1, kind: input, shape index: {}]
  %s2 = inlined_call_operand.vmem [shape: f32[2,32], index: 2, kind: input, shape index: {}]
  %s3 = inlined_call_operand.vmem [shape: f32[1,32], index: 3, kind: input, shape index: {}]
  %s4 = inlined_call_operand.vmem [shape: f32[2,128], index: 4, kind: input, shape index: {}]
  %s5 = inlined_call_operand.vmem [shape: f32[32,128], index: 5, kind: input, shape index: {}]
  %s6 = inlined_call_operand.vmem [shape: f32[1,128], index: 6, kind: input, shape index: {}]
  %s7 = inlined_call_operand.vmem [shape: f32[32,2], index: 7, kind: input, shape index: {}]
  %s8 = inlined_call_operand.vmem [shape: f32[1,2], index: 8, kind: input, shape index: {}]
  %s9 = inlined_call_operand.vmem [shape: f32[16,2], index: 9, kind: output, shape index: {}]
  %s10 = sld [smem:[#allocation0]]
  $region46: #{tpu_custom_call.1} parent=0
    _
  %s12 = ssub.s32 1, %s10
  %s13 = scalar_select 0, %s12, %s10
  // Predicated region
  $region2: #{tpu_custom_call.1} parent=0 // pred_check
    _
  $region3: #{tpu_custom_call.1} parent=0 // pred_check_branch
    %15 = sbr.rel (0) target = $region5
  $region4: #{tpu_custom_call.1} parent=0 // pred_region
    _
  $region5: #{tpu_custom_call.1} parent=0 // pred_fallthru
    _
  // Predicated region
  $region6: #{tpu_custom_call.1} parent=0 // pred_check
    _
  $region7: #{tpu_custom_call.1} parent=0 // pred_check_branch
    %17 = sbr.rel (0) target = $region9
  $region8: #{tpu_custom_call.1} parent=0 // pred_region
    _
  $region9: #{tpu_custom_call.1} parent=0 // pred_fallthru
    _
  // Predicated region
  $region10: #{tpu_custom_call.1} parent=0 // pred_check
    _
  $region11: #{tpu_custom_call.1} parent=0 // pred_check_branch
    %19 = sbr.rel (0) target = $region13
  $region12: #{tpu_custom_call.1} parent=0 // pred_region
    _
  $region13: #{tpu_custom_call.1} parent=0 // pred_fallthru
    _
  // Predicated region
  $region14: #{tpu_custom_call.1} parent=0 // pred_check
    _
  $region15: #{tpu_custom_call.1} parent=0 // pred_check_branch
    %21 = sbr.rel (0) target = $region17
  $region16: #{tpu_custom_call.1} parent=0 // pred_region
    _
  $region17: #{tpu_custom_call.1} parent=0 // pred_fallthru
    _
  // Predicated region
  $region18: #{tpu_custom_call.1} parent=0 // pred_check
    _
  $region19: #{tpu_custom_call.1} parent=0 // pred_check_branch
    %23 = sbr.rel (0) target = $region21
  $region20: #{tpu_custom_call.1} parent=0 // pred_region
    _
  $region21: #{tpu_custom_call.1} parent=0 // pred_fallthru
    _
  // Predicated region
  $region22: #{tpu_custom_call.1} parent=0 // pred_check
    _
  $region23: #{tpu_custom_call.1} parent=0 // pred_check_branch
    %25 = sbr.rel (0) target = $region25
  $region24: #{tpu_custom_call.1} parent=0 // pred_region
    _
  $region25: #{tpu_custom_call.1} parent=0 // pred_fallthru
    _
  // Predicated region
  $region26: #{tpu_custom_call.1} parent=0 // pred_check
    _
  $region27: #{tpu_custom_call.1} parent=0 // pred_check_branch
    %27 = sbr.rel (0) target = $region29
  $region28: #{tpu_custom_call.1} parent=0 // pred_region
    _
  $region29: #{tpu_custom_call.1} parent=0 // pred_fallthru
    _
  // Predicated region
  $region30: #{tpu_custom_call.1} parent=0 // pred_check
    _
  $region31: #{tpu_custom_call.1} parent=0 // pred_check_branch
    %29 = sbr.rel (0) target = $region33
  $region32: #{tpu_custom_call.1} parent=0 // pred_region
    _
  $region33: #{tpu_custom_call.1} parent=0 // pred_fallthru
    _
  // Predicated region
  $region34: #{tpu_custom_call.1} parent=0 // pred_check
    _
  $region35: #{tpu_custom_call.1} parent=0 // pred_check_branch
    %31 = sbr.rel (0) target = $region37
  $region36: #{tpu_custom_call.1} parent=0 // pred_region
    _
  $region37: #{tpu_custom_call.1} parent=0 // pred_fallthru
    _
  %v32 = vld [vmem:[%s2] sm:$0x3]
  %v33 = vld [vmem:[%s3] sm:$0x1]
  %v34 = vld [vmem:[%s4] sm:$0x3]
  %v35 = vld [vmem:[%s5] sm:$0xff]
  %v36 = vld [vmem:[%s5 + $0x8] sm:$0xff]
  %v37 = vld [vmem:[%s5 + $0x10] sm:$0xff]
  %v38 = vld [vmem:[%s5 + $0x18] sm:$0xff]
  %v39 = vld [vmem:[%s6] sm:$0x1]
  %v40 = vld [vmem:[%s7] sm:$0xff]
  %v41 = vld [vmem:[%s7 + $0x8] sm:$0xff]
  %v42 = vld [vmem:[%s7 + $0x10] sm:$0xff]
  %v43 = vld [vmem:[%s7 + $0x18] sm:$0xff]
  %v44 = vld [vmem:[%s8] sm:$0x1]
  %v45 = vld [vmem:[%s0] sm:$0x3]
  %v47 = vlaneseq
  %v48 = vshrl.u32 %v47, 7
  %v49 = vsub.s32 0, %v48
  %v50 = vrot.slane %v33, %v49
  %vm52 = vcmask 15360
  %v54 = vsel %vm52, %v45, 0
  %vm56 = vcmask 1041408
  %v58 = vsel %vm56, %v32, 0
  %60 = vmatprep.subr.mxu0 0.0
  %61 = vmatpush1.msra.mxu0 0.0
  %62 = vmatprep.subr.mxu0 0.0
  %63 = vmatpush1.msra.mxu0 0.0
  %64 = vmatprep.subr.mxu0 0.0
  %65 = vmatpush1.msra.mxu0 0.0
  %66 = vmatprep.subr.mxu0 0.0
  %67 = vmatpush1.msra.mxu0 0.0
  %68 = vmatprep.subr.mxu0 0.0
  %69 = vmatpush1.msra.mxu0 0.0
  %70 = vmatprep.subr.mxu0 0.0
  %71 = vmatpush1.msra.mxu0 0.0
  %72 = vmatprep.subr.mxu0 0.0
  %73 = vmatpush1.msra.mxu0 0.0
  %74 = vmatprep.subr.mxu0 0.0
  %75 = vmatpush1.msra.mxu0 0.0
  %76 = vmatprep.subr.mxu0 0.0
  %77 = vmatpush1.msra.mxu0 0.0
  %78 = vmatprep.subr.mxu0 0.0
  %79 = vmatpush1.msra.mxu0 0.0
  %80 = vmatprep.subr.mxu0 0.0
  %81 = vmatpush1.msra.mxu0 0.0
  %82 = vmatprep.subr.mxu0 0.0
  %83 = vmatpush1.msra.mxu0 0.0
  %84 = vmatprep.subr.mxu0 0.0
  %85 = vmatpush1.msra.mxu0 0.0
  %86 = vmatprep.subr.mxu0 0.0
  %87 = vmatpush1.msra.mxu0 0.0
  %88 = vmatprep.subr.mxu0 0.0
  %89 = vmatpush1.msra.mxu0 0.0
  %90 = vmatprep.subr.mxu0 0.0
  %91 = vmatpush1.msra.mxu0 %v58
  %92 = vmatprep.subr.mxu0 0.0
  %93 = vmatpush2.msra.mxu0 0.0
  %94 = vmatprep.subr.mxu0 0.0
  %95 = vmatpush2.msra.mxu0 0.0
  %96 = vmatprep.subr.mxu0 0.0
  %97 = vmatpush2.msra.mxu0 0.0
  %98 = vmatprep.subr.mxu0 0.0
  %99 = vmatpush2.msra.mxu0 0.0
  %100 = vmatprep.subr.mxu0 0.0
  %101 = vmatpush2.msra.mxu0 0.0
  %102 = vmatprep.subr.mxu0 0.0
  %103 = vmatpush2.msra.mxu0 0.0
  %104 = vmatprep.subr.mxu0 0.0
  %105 = vmatpush2.msra.mxu0 0.0
  %106 = vmatprep.subr.mxu0 0.0
  %107 = vmatpush2.msra.mxu0 0.0
  %108 = vmatprep.subr.mxu0 0.0
  %109 = vmatpush2.msra.mxu0 0.0
  %110 = vmatprep.subr.mxu0 0.0
  %111 = vmatpush2.msra.mxu0 0.0
  %112 = vmatprep.subr.mxu0 0.0
  %113 = vmatpush2.msra.mxu0 0.0
  %114 = vmatprep.subr.mxu0 0.0
  %115 = vmatpush2.msra.mxu0 0.0
  %116 = vmatprep.subr.mxu0 0.0
  %117 = vmatpush2.msra.mxu0 0.0
  %118 = vmatprep.subr.mxu0 0.0
  %119 = vmatpush2.msra.mxu0 0.0
  %120 = vmatprep.subr.mxu0 0.0
  %121 = vmatpush2.msra.mxu0 0.0
  %122 = vmatprep.subr.mxu0 0.0
  %123 = vmatpush2.msra.mxu0 0.0
  %124 = vmatprep.mubr.f32.mxu0 0.0
  %125 = vmatmul.mubr.f32.gmra.mxu0 %v54
  %v126 = vpop.f32.mrf.mxu0
  %v127 = vadd.f32 %v50, %v126
  %v128 = vpop.f32.mrf.mxu0
  %129 = vdwg.mxu0
  %v130 = vtanh.pop %v127
  %v131 = vld [vmem:[%s1] sm:$0xff]
  %v132 = vld [vmem:[%s1 + $0x8] sm:$0xff]
  %v134 = vlaneseq
  %v135 = vshrl.u32 %v134, 7
  %v136 = vsub.s32 0, %v135
  %v137 = vrot.slane %v39, %v136
  %v140 = vsel %vm52, %v131, 0
  %v143 = vsel %vm52, %v132, 0
  %v146 = vsel %vm56, %v34, 0
  %148 = vmatprep.subr.mxu0 0.0
  %149 = vmatpush1.msra.mxu0 0.0
  %150 = vmatprep.subr.mxu0 0.0
  %151 = vmatpush1.msra.mxu0 0.0
  %152 = vmatprep.subr.mxu0 0.0
  %153 = vmatpush1.msra.mxu0 0.0
  %154 = vmatprep.subr.mxu0 0.0
  %155 = vmatpush1.msra.mxu0 0.0
  %156 = vmatprep.subr.mxu0 0.0
  %157 = vmatpush1.msra.mxu0 0.0
  %158 = vmatprep.subr.mxu0 0.0
  %159 = vmatpush1.msra.mxu0 0.0
  %160 = vmatprep.subr.mxu0 0.0
  %161 = vmatpush1.msra.mxu0 0.0
  %162 = vmatprep.subr.mxu0 0.0
  %163 = vmatpush1.msra.mxu0 0.0
  %164 = vmatprep.subr.mxu0 0.0
  %165 = vmatpush1.msra.mxu0 0.0
  %166 = vmatprep.subr.mxu0 0.0
  %167 = vmatpush1.msra.mxu0 0.0
  %168 = vmatprep.subr.mxu0 0.0
  %169 = vmatpush1.msra.mxu0 0.0
  %170 = vmatprep.subr.mxu0 0.0
  %171 = vmatpush1.msra.mxu0 0.0
  %172 = vmatprep.subr.mxu0 0.0
  %173 = vmatpush1.msra.mxu0 0.0
  %174 = vmatprep.subr.mxu0 0.0
  %175 = vmatpush1.msra.mxu0 0.0
  %176 = vmatprep.subr.mxu0 0.0
  %177 = vmatpush1.msra.mxu0 0.0
  %178 = vmatprep.subr.mxu0 0.0
  %179 = vmatpush1.msra.mxu0 %v146
  %180 = vmatprep.subr.mxu0 0.0
  %181 = vmatpush2.msra.mxu0 0.0
  %182 = vmatprep.subr.mxu0 0.0
  %183 = vmatpush2.msra.mxu0 0.0
  %184 = vmatprep.subr.mxu0 0.0
  %185 = vmatpush2.msra.mxu0 0.0
  %186 = vmatprep.subr.mxu0 0.0
  %187 = vmatpush2.msra.mxu0 0.0
  %188 = vmatprep.subr.mxu0 0.0
  %189 = vmatpush2.msra.mxu0 0.0
  %190 = vmatprep.subr.mxu0 0.0
  %191 = vmatpush2.msra.mxu0 0.0
  %192 = vmatprep.subr.mxu0 0.0
  %193 = vmatpush2.msra.mxu0 0.0
  %194 = vmatprep.subr.mxu0 0.0
  %195 = vmatpush2.msra.mxu0 0.0
  %196 = vmatprep.subr.mxu0 0.0
  %197 = vmatpush2.msra.mxu0 0.0
  %198 = vmatprep.subr.mxu0 0.0
  %199 = vmatpush2.msra.mxu0 0.0
  %200 = vmatprep.subr.mxu0 0.0
  %201 = vmatpush2.msra.mxu0 0.0
  %202 = vmatprep.subr.mxu0 0.0
  %203 = vmatpush2.msra.mxu0 0.0
  %204 = vmatprep.subr.mxu0 0.0
  %205 = vmatpush2.msra.mxu0 0.0
  %206 = vmatprep.subr.mxu0 0.0
  %207 = vmatpush2.msra.mxu0 0.0
  %208 = vmatprep.subr.mxu0 0.0
  %209 = vmatpush2.msra.mxu0 0.0
  %210 = vmatprep.subr.mxu0 0.0
  %211 = vmatpush2.msra.mxu0 0.0
  %212 = vmatprep.mubr.f32.mxu0 0.0
  %213 = vmatmul.mubr.f32.gmra.mxu0 %v140
  %v214 = vpop.f32.mrf.mxu0
  %v215 = vadd.f32 %v137, %v214
  %v216 = vpop.f32.mrf.mxu0
  %217 = vmatprep.mubr.f32.mxu0 0.0
  %218 = vmatmul.mubr.f32.gmra.mxu0 %v143
  %v219 = vpop.f32.mrf.mxu0
  %v220 = vadd.f32 %v137, %v219
  %v221 = vpop.f32.mrf.mxu0
  %222 = vdwg.mxu0
  %vm223 = vcmask 261120
  %v225 = vsel %vm223, %v130, 0
  %227 = vmatprep.subr.mxu0 0.0
  %228 = vmatpush1.msra.mxu0 0.0
  %229 = vmatprep.subr.mxu0 0.0
  %230 = vmatpush1.msra.mxu0 0.0
  %231 = vmatprep.subr.mxu0 0.0
  %232 = vmatpush1.msra.mxu0 0.0
  %233 = vmatprep.subr.mxu0 0.0
  %234 = vmatpush1.msra.mxu0 0.0
  %235 = vmatprep.subr.mxu0 0.0
  %236 = vmatpush1.msra.mxu0 0.0
  %237 = vmatprep.subr.mxu0 0.0
  %238 = vmatpush1.msra.mxu0 0.0
  %239 = vmatprep.subr.mxu0 0.0
  %240 = vmatpush1.msra.mxu0 0.0
  %241 = vmatprep.subr.mxu0 0.0
  %242 = vmatpush1.msra.mxu0 0.0
  %243 = vmatprep.subr.mxu0 0.0
  %244 = vmatpush1.msra.mxu0 0.0
  %245 = vmatprep.subr.mxu0 0.0
  %246 = vmatpush1.msra.mxu0 0.0
  %247 = vmatprep.subr.mxu0 0.0
  %248 = vmatpush1.msra.mxu0 0.0
  %249 = vmatprep.subr.mxu0 0.0
  %250 = vmatpush1.msra.mxu0 0.0
  %251 = vmatprep.subr.mxu0 0.0
  %252 = vmatpush1.msra.mxu0 %v38
  %253 = vmatprep.subr.mxu0 0.0
  %254 = vmatpush1.msra.mxu0 %v37
  %255 = vmatprep.subr.mxu0 0.0
  %256 = vmatpush1.msra.mxu0 %v36
  %257 = vmatprep.subr.mxu0 0.0
  %258 = vmatpush1.msra.mxu0 %v35
  %259 = vmatprep.subr.mxu0 0.0
  %260 = vmatpush2.msra.mxu0 0.0
  %261 = vmatprep.subr.mxu0 0.0
  %262 = vmatpush2.msra.mxu0 0.0
  %263 = vmatprep.subr.mxu0 0.0
  %264 = vmatpush2.msra.mxu0 0.0
  %265 = vmatprep.subr.mxu0 0.0
  %266 = vmatpush2.msra.mxu0 0.0
  %267 = vmatprep.subr.mxu0 0.0
  %268 = vmatpush2.msra.mxu0 0.0
  %269 = vmatprep.subr.mxu0 0.0
  %270 = vmatpush2.msra.mxu0 0.0
  %271 = vmatprep.subr.mxu0 0.0
  %272 = vmatpush2.msra.mxu0 0.0
  %273 = vmatprep.subr.mxu0 0.0
  %274 = vmatpush2.msra.mxu0 0.0
  %275 = vmatprep.subr.mxu0 0.0
  %276 = vmatpush2.msra.mxu0 0.0
  %277 = vmatprep.subr.mxu0 0.0
  %278 = vmatpush2.msra.mxu0 0.0
  %279 = vmatprep.subr.mxu0 0.0
  %280 = vmatpush2.msra.mxu0 0.0
  %281 = vmatprep.subr.mxu0 0.0
  %282 = vmatpush2.msra.mxu0 0.0
  %283 = vmatprep.subr.mxu0 0.0
  %284 = vmatpush2.msra.mxu0 0.0
  %285 = vmatprep.subr.mxu0 0.0
  %286 = vmatpush2.msra.mxu0 0.0
  %287 = vmatprep.subr.mxu0 0.0
  %288 = vmatpush2.msra.mxu0 0.0
  %289 = vmatprep.subr.mxu0 0.0
  %290 = vmatpush2.msra.mxu0 0.0
  %291 = vmatprep.mubr.f32.mxu0 0.0
  %292 = vmatmul.mubr.f32.gmra.mxu0 %v225
  %v293 = vpop.f32.mrf.mxu0
  %v294 = vadd.f32 0.0, %v293
  %v295 = vpop.f32.mrf.mxu0
  %296 = vdwg.mxu0
  %v297 = vadd.f32 %v215, %v294
  %v298 = vxor.u32 %v297, 2147483648
  %v299 = vmul.f32 %v298, 1.442695
  %v300 = vpow.pop %v299
  %v301 = vadd.f32 %v300, 1.0
  %v302 = vrcp.pop %v301
  %v303 = vmul.f32 1.0, %v302
  %v304 = vtanh.pop %v297
  %v305 = vmul.f32 %v303, 0.0
  %307 = vrot.lane.b32.xlu0 %v304, 64
  %v308 = vpop.permute.xlu0 %307
  %v310 = vmul.f32 %v303, %v308
  %312 = vrot.lane.b32.xlu0 %v310, 32
  %v313 = vpop.permute.xlu0 %312
  %v315 = vadd.f32 %v305, %v313
  %v316 = vtanh.pop %v315
  %318 = vrot.lane.b32.xlu0 %v316, 64
  %v319 = vpop.permute.xlu0 %318
  %v321 = vmul.f32 %v303, %v319
  %323 = vrot.lane.b32.xlu0 %v321, 32
  %v324 = vpop.permute.xlu0 %323
  %v325 = vsel %vm223, %v324, 0
  %327 = vmatprep.subr.mxu0 0.0
  %328 = vmatpush1.msra.mxu0 0.0
  %329 = vmatprep.subr.mxu0 0.0
  %330 = vmatpush1.msra.mxu0 0.0
  %331 = vmatprep.subr.mxu0 0.0
  %332 = vmatpush1.msra.mxu0 0.0
  %333 = vmatprep.subr.mxu0 0.0
  %334 = vmatpush1.msra.mxu0 0.0
  %335 = vmatprep.subr.mxu0 0.0
  %336 = vmatpush1.msra.mxu0 0.0
  %337 = vmatprep.subr.mxu0 0.0
  %338 = vmatpush1.msra.mxu0 0.0
  %339 = vmatprep.subr.mxu0 0.0
  %340 = vmatpush1.msra.mxu0 0.0
  %341 = vmatprep.subr.mxu0 0.0
  %342 = vmatpush1.msra.mxu0 0.0
  %343 = vmatprep.subr.mxu0 0.0
  %344 = vmatpush1.msra.mxu0 0.0
  %345 = vmatprep.subr.mxu0 0.0
  %346 = vmatpush1.msra.mxu0 0.0
  %347 = vmatprep.subr.mxu0 0.0
  %348 = vmatpush1.msra.mxu0 0.0
  %349 = vmatprep.subr.mxu0 0.0
  %350 = vmatpush1.msra.mxu0 0.0
  %351 = vmatprep.subr.mxu0 0.0
  %352 = vmatpush1.msra.mxu0 %v38
  %353 = vmatprep.subr.mxu0 0.0
  %354 = vmatpush1.msra.mxu0 %v37
  %355 = vmatprep.subr.mxu0 0.0
  %356 = vmatpush1.msra.mxu0 %v36
  %357 = vmatprep.subr.mxu0 0.0
  %358 = vmatpush1.msra.mxu0 %v35
  %359 = vmatprep.subr.mxu0 0.0
  %360 = vmatpush2.msra.mxu0 0.0
  %361 = vmatprep.subr.mxu0 0.0
  %362 = vmatpush2.msra.mxu0 0.0
  %363 = vmatprep.subr.mxu0 0.0
  %364 = vmatpush2.msra.mxu0 0.0
  %365 = vmatprep.subr.mxu0 0.0
  %366 = vmatpush2.msra.mxu0 0.0
  %367 = vmatprep.subr.mxu0 0.0
  %368 = vmatpush2.msra.mxu0 0.0
  %369 = vmatprep.subr.mxu0 0.0
  %370 = vmatpush2.msra.mxu0 0.0
  %371 = vmatprep.subr.mxu0 0.0
  %372 = vmatpush2.msra.mxu0 0.0
  %373 = vmatprep.subr.mxu0 0.0
  %374 = vmatpush2.msra.mxu0 0.0
  %375 = vmatprep.subr.mxu0 0.0
  %376 = vmatpush2.msra.mxu0 0.0
  %377 = vmatprep.subr.mxu0 0.0
  %378 = vmatpush2.msra.mxu0 0.0
  %379 = vmatprep.subr.mxu0 0.0
  %380 = vmatpush2.msra.mxu0 0.0
  %381 = vmatprep.subr.mxu0 0.0
  %382 = vmatpush2.msra.mxu0 0.0
  %383 = vmatprep.subr.mxu0 0.0
  %384 = vmatpush2.msra.mxu0 0.0
  %385 = vmatprep.subr.mxu0 0.0
  %386 = vmatpush2.msra.mxu0 0.0
  %387 = vmatprep.subr.mxu0 0.0
  %388 = vmatpush2.msra.mxu0 0.0
  %389 = vmatprep.subr.mxu0 0.0
  %390 = vmatpush2.msra.mxu0 0.0
  %391 = vmatprep.mubr.f32.mxu0 0.0
  %392 = vmatmul.mubr.f32.gmra.mxu0 %v325
  %v393 = vpop.f32.mrf.mxu0
  %v394 = vadd.f32 0.0, %v393
  %v395 = vpop.f32.mrf.mxu0
  %396 = vdwg.mxu0
  %v398 = vrot.slane %v394, 6
  %v400 = vadd.f32 %v215, %v398
  %v401 = vxor.u32 %v400, 2147483648
  %v402 = vmul.f32 %v401, 1.442695
  %v403 = vpow.pop %v402
  %v404 = vadd.f32 %v403, 1.0
  %v405 = vrcp.pop %v404
  %v406 = vmul.f32 1.0, %v405
  %v407 = vtanh.pop %v400
  %v409 = vrot.slane %v315, 6
  %v411 = vmul.f32 %v406, %v409
  %413 = vrot.lane.b32.xlu0 %v407, 64
  %v414 = vpop.permute.xlu0 %413
  %v416 = vmul.f32 %v406, %v414
  %418 = vrot.lane.b32.xlu0 %v416, 32
  %v419 = vpop.permute.xlu0 %418
  %v421 = vadd.f32 %v411, %v419
  %v422 = vtanh.pop %v421
  %424 = vrot.lane.b32.xlu0 %v422, 64
  %v425 = vpop.permute.xlu0 %424
  %v427 = vmul.f32 %v406, %v425
  %v429 = vrot.slane %v427, 2
  %430 = vrot.lane.b32.xlu0 %v429, 32
  %v431 = vpop.permute.xlu0 %430
  %v432 = vsel %vm223, %v431, 0
  %434 = vmatprep.subr.mxu0 0.0
  %435 = vmatpush1.msra.mxu0 0.0
  %436 = vmatprep.subr.mxu0 0.0
  %437 = vmatpush1.msra.mxu0 0.0
  %438 = vmatprep.subr.mxu0 0.0
  %439 = vmatpush1.msra.mxu0 0.0
  %440 = vmatprep.subr.mxu0 0.0
  %441 = vmatpush1.msra.mxu0 0.0
  %442 = vmatprep.subr.mxu0 0.0
  %443 = vmatpush1.msra.mxu0 0.0
  %444 = vmatprep.subr.mxu0 0.0
  %445 = vmatpush1.msra.mxu0 0.0
  %446 = vmatprep.subr.mxu0 0.0
  %447 = vmatpush1.msra.mxu0 0.0
  %448 = vmatprep.subr.mxu0 0.0
  %449 = vmatpush1.msra.mxu0 0.0
  %450 = vmatprep.subr.mxu0 0.0
  %451 = vmatpush1.msra.mxu0 0.0
  %452 = vmatprep.subr.mxu0 0.0
  %453 = vmatpush1.msra.mxu0 0.0
  %454 = vmatprep.subr.mxu0 0.0
  %455 = vmatpush1.msra.mxu0 0.0
  %456 = vmatprep.subr.mxu0 0.0
  %457 = vmatpush1.msra.mxu0 0.0
  %458 = vmatprep.subr.mxu0 0.0
  %459 = vmatpush1.msra.mxu0 %v38
  %460 = vmatprep.subr.mxu0 0.0
  %461 = vmatpush1.msra.mxu0 %v37
  %462 = vmatprep.subr.mxu0 0.0
  %463 = vmatpush1.msra.mxu0 %v36
  %464 = vmatprep.subr.mxu0 0.0
  %465 = vmatpush1.msra.mxu0 %v35
  %466 = vmatprep.subr.mxu0 0.0
  %467 = vmatpush2.msra.mxu0 0.0
  %468 = vmatprep.subr.mxu0 0.0
  %469 = vmatpush2.msra.mxu0 0.0
  %470 = vmatprep.subr.mxu0 0.0
  %471 = vmatpush2.msra.mxu0 0.0
  %472 = vmatprep.subr.mxu0 0.0
  %473 = vmatpush2.msra.mxu0 0.0
  %474 = vmatprep.subr.mxu0 0.0
  %475 = vmatpush2.msra.mxu0 0.0
  %476 = vmatprep.subr.mxu0 0.0
  %477 = vmatpush2.msra.mxu0 0.0
  %478 = vmatprep.subr.mxu0 0.0
  %479 = vmatpush2.msra.mxu0 0.0
  %480 = vmatprep.subr.mxu0 0.0
  %481 = vmatpush2.msra.mxu0 0.0
  %482 = vmatprep.subr.mxu0 0.0
  %483 = vmatpush2.msra.mxu0 0.0
  %484 = vmatprep.subr.mxu0 0.0
  %485 = vmatpush2.msra.mxu0 0.0
  %486 = vmatprep.subr.mxu0 0.0
  %487 = vmatpush2.msra.mxu0 0.0
  %488 = vmatprep.subr.mxu0 0.0
  %489 = vmatpush2.msra.mxu0 0.0
  %490 = vmatprep.subr.mxu0 0.0
  %491 = vmatpush2.msra.mxu0 0.0
  %492 = vmatprep.subr.mxu0 0.0
  %493 = vmatpush2.msra.mxu0 0.0
  %494 = vmatprep.subr.mxu0 0.0
  %495 = vmatpush2.msra.mxu0 0.0
  %496 = vmatprep.subr.mxu0 0.0
  %497 = vmatpush2.msra.mxu0 0.0
  %498 = vmatprep.mubr.f32.mxu0 0.0
  %499 = vmatmul.mubr.f32.gmra.mxu0 %v432
  %v500 = vpop.f32.mrf.mxu0
  %v501 = vadd.f32 0.0, %v500
  %v502 = vpop.f32.mrf.mxu0
  %503 = vdwg.mxu0
  %v505 = vrot.slane %v501, 4
  %v507 = vadd.f32 %v215, %v505
  %v508 = vxor.u32 %v507, 2147483648
  %v509 = vmul.f32 %v508, 1.442695
  %v510 = vpow.pop %v509
  %v511 = vadd.f32 %v510, 1.0
  %v512 = vrcp.pop %v511
  %v513 = vmul.f32 1.0, %v512
  %v514 = vtanh.pop %v507
  %v516 = vrot.slane %v421, 6
  %v518 = vmul.f32 %v513, %v516
  %520 = vrot.lane.b32.xlu0 %v514, 64
  %v521 = vpop.permute.xlu0 %520
  %v523 = vmul.f32 %v513, %v521
  %525 = vrot.lane.b32.xlu0 %v523, 32
  %v526 = vpop.permute.xlu0 %525
  %v528 = vadd.f32 %v518, %v526
  %v529 = vtanh.pop %v528
  %531 = vrot.lane.b32.xlu0 %v529, 64
  %v532 = vpop.permute.xlu0 %531
  %v534 = vmul.f32 %v513, %v532
  %v536 = vrot.slane %v534, 4
  %537 = vrot.lane.b32.xlu0 %v536, 32
  %v538 = vpop.permute.xlu0 %537
  %v539 = vsel %vm223, %v538, 0
  %541 = vmatprep.subr.mxu0 0.0
  %542 = vmatpush1.msra.mxu0 0.0
  %543 = vmatprep.subr.mxu0 0.0
  %544 = vmatpush1.msra.mxu0 0.0
  %545 = vmatprep.subr.mxu0 0.0
  %546 = vmatpush1.msra.mxu0 0.0
  %547 = vmatprep.subr.mxu0 0.0
  %548 = vmatpush1.msra.mxu0 0.0
  %549 = vmatprep.subr.mxu0 0.0
  %550 = vmatpush1.msra.mxu0 0.0
  %551 = vmatprep.subr.mxu0 0.0
  %552 = vmatpush1.msra.mxu0 0.0
  %553 = vmatprep.subr.mxu0 0.0
  %554 = vmatpush1.msra.mxu0 0.0
  %555 = vmatprep.subr.mxu0 0.0
  %556 = vmatpush1.msra.mxu0 0.0
  %557 = vmatprep.subr.mxu0 0.0
  %558 = vmatpush1.msra.mxu0 0.0
  %559 = vmatprep.subr.mxu0 0.0
  %560 = vmatpush1.msra.mxu0 0.0
  %561 = vmatprep.subr.mxu0 0.0
  %562 = vmatpush1.msra.mxu0 0.0
  %563 = vmatprep.subr.mxu0 0.0
  %564 = vmatpush1.msra.mxu0 0.0
  %565 = vmatprep.subr.mxu0 0.0
  %566 = vmatpush1.msra.mxu0 %v38
  %567 = vmatprep.subr.mxu0 0.0
  %568 = vmatpush1.msra.mxu0 %v37
  %569 = vmatprep.subr.mxu0 0.0
  %570 = vmatpush1.msra.mxu0 %v36
  %571 = vmatprep.subr.mxu0 0.0
  %572 = vmatpush1.msra.mxu0 %v35
  %573 = vmatprep.subr.mxu0 0.0
  %574 = vmatpush2.msra.mxu0 0.0
  %575 = vmatprep.subr.mxu0 0.0
  %576 = vmatpush2.msra.mxu0 0.0
  %577 = vmatprep.subr.mxu0 0.0
  %578 = vmatpush2.msra.mxu0 0.0
  %579 = vmatprep.subr.mxu0 0.0
  %580 = vmatpush2.msra.mxu0 0.0
  %581 = vmatprep.subr.mxu0 0.0
  %582 = vmatpush2.msra.mxu0 0.0
  %583 = vmatprep.subr.mxu0 0.0
  %584 = vmatpush2.msra.mxu0 0.0
  %585 = vmatprep.subr.mxu0 0.0
  %586 = vmatpush2.msra.mxu0 0.0
  %587 = vmatprep.subr.mxu0 0.0
  %588 = vmatpush2.msra.mxu0 0.0
  %589 = vmatprep.subr.mxu0 0.0
  %590 = vmatpush2.msra.mxu0 0.0
  %591 = vmatprep.subr.mxu0 0.0
  %592 = vmatpush2.msra.mxu0 0.0
  %593 = vmatprep.subr.mxu0 0.0
  %594 = vmatpush2.msra.mxu0 0.0
  %595 = vmatprep.subr.mxu0 0.0
  %596 = vmatpush2.msra.mxu0 0.0
  %597 = vmatprep.subr.mxu0 0.0
  %598 = vmatpush2.msra.mxu0 0.0
  %599 = vmatprep.subr.mxu0 0.0
  %600 = vmatpush2.msra.mxu0 0.0
  %601 = vmatprep.subr.mxu0 0.0
  %602 = vmatpush2.msra.mxu0 0.0
  %603 = vmatprep.subr.mxu0 0.0
  %604 = vmatpush2.msra.mxu0 0.0
  %605 = vmatprep.mubr.f32.mxu0 0.0
  %606 = vmatmul.mubr.f32.gmra.mxu0 %v539
  %v607 = vpop.f32.mrf.mxu0
  %v608 = vadd.f32 0.0, %v607
  %v609 = vpop.f32.mrf.mxu0
  %610 = vdwg.mxu0
  %v612 = vrot.slane %v608, 2
  %v614 = vadd.f32 %v215, %v612
  %v615 = vxor.u32 %v614, 2147483648
  %v616 = vmul.f32 %v615, 1.442695
  %v617 = vpow.pop %v616
  %v618 = vadd.f32 %v617, 1.0
  %v619 = vrcp.pop %v618
  %v620 = vmul.f32 1.0, %v619
  %v621 = vtanh.pop %v614
  %v623 = vrot.slane %v528, 6
  %v625 = vmul.f32 %v620, %v623
  %627 = vrot.lane.b32.xlu0 %v621, 64
  %v628 = vpop.permute.xlu0 %627
  %v630 = vmul.f32 %v620, %v628
  %632 = vrot.lane.b32.xlu0 %v630, 32
  %v633 = vpop.permute.xlu0 %632
  %v635 = vadd.f32 %v625, %v633
  %v636 = vtanh.pop %v635
  %638 = vrot.lane.b32.xlu0 %v636, 64
  %v639 = vpop.permute.xlu0 %638
  %v641 = vmul.f32 %v620, %v639
  %v643 = vrot.slane %v641, 6
  %644 = vrot.lane.b32.xlu0 %v643, 32
  %v645 = vpop.permute.xlu0 %644
  %v646 = vsel %vm223, %v645, 0
  %648 = vmatprep.subr.mxu0 0.0
  %649 = vmatpush1.msra.mxu0 0.0
  %650 = vmatprep.subr.mxu0 0.0
  %651 = vmatpush1.msra.mxu0 0.0
  %652 = vmatprep.subr.mxu0 0.0
  %653 = vmatpush1.msra.mxu0 0.0
  %654 = vmatprep.subr.mxu0 0.0
  %655 = vmatpush1.msra.mxu0 0.0
  %656 = vmatprep.subr.mxu0 0.0
  %657 = vmatpush1.msra.mxu0 0.0
  %658 = vmatprep.subr.mxu0 0.0
  %659 = vmatpush1.msra.mxu0 0.0
  %660 = vmatprep.subr.mxu0 0.0
  %661 = vmatpush1.msra.mxu0 0.0
  %662 = vmatprep.subr.mxu0 0.0
  %663 = vmatpush1.msra.mxu0 0.0
  %664 = vmatprep.subr.mxu0 0.0
  %665 = vmatpush1.msra.mxu0 0.0
  %666 = vmatprep.subr.mxu0 0.0
  %667 = vmatpush1.msra.mxu0 0.0
  %668 = vmatprep.subr.mxu0 0.0
  %669 = vmatpush1.msra.mxu0 0.0
  %670 = vmatprep.subr.mxu0 0.0
  %671 = vmatpush1.msra.mxu0 0.0
  %672 = vmatprep.subr.mxu0 0.0
  %673 = vmatpush1.msra.mxu0 %v38
  %674 = vmatprep.subr.mxu0 0.0
  %675 = vmatpush1.msra.mxu0 %v37
  %676 = vmatprep.subr.mxu0 0.0
  %677 = vmatpush1.msra.mxu0 %v36
  %678 = vmatprep.subr.mxu0 0.0
  %679 = vmatpush1.msra.mxu0 %v35
  %680 = vmatprep.subr.mxu0 0.0
  %681 = vmatpush2.msra.mxu0 0.0
  %682 = vmatprep.subr.mxu0 0.0
  %683 = vmatpush2.msra.mxu0 0.0
  %684 = vmatprep.subr.mxu0 0.0
  %685 = vmatpush2.msra.mxu0 0.0
  %686 = vmatprep.subr.mxu0 0.0
  %687 = vmatpush2.msra.mxu0 0.0
  %688 = vmatprep.subr.mxu0 0.0
  %689 = vmatpush2.msra.mxu0 0.0
  %690 = vmatprep.subr.mxu0 0.0
  %691 = vmatpush2.msra.mxu0 0.0
  %692 = vmatprep.subr.mxu0 0.0
  %693 = vmatpush2.msra.mxu0 0.0
  %694 = vmatprep.subr.mxu0 0.0
  %695 = vmatpush2.msra.mxu0 0.0
  %696 = vmatprep.subr.mxu0 0.0
  %697 = vmatpush2.msra.mxu0 0.0
  %698 = vmatprep.subr.mxu0 0.0
  %699 = vmatpush2.msra.mxu0 0.0
  %700 = vmatprep.subr.mxu0 0.0
  %701 = vmatpush2.msra.mxu0 0.0
  %702 = vmatprep.subr.mxu0 0.0
  %703 = vmatpush2.msra.mxu0 0.0
  %704 = vmatprep.subr.mxu0 0.0
  %705 = vmatpush2.msra.mxu0 0.0
  %706 = vmatprep.subr.mxu0 0.0
  %707 = vmatpush2.msra.mxu0 0.0
  %708 = vmatprep.subr.mxu0 0.0
  %709 = vmatpush2.msra.mxu0 0.0
  %710 = vmatprep.subr.mxu0 0.0
  %711 = vmatpush2.msra.mxu0 0.0
  %712 = vmatprep.mubr.f32.mxu0 0.0
  %713 = vmatmul.mubr.f32.gmra.mxu0 %v646
  %v714 = vpop.f32.mrf.mxu0
  %v715 = vadd.f32 0.0, %v714
  %v716 = vpop.f32.mrf.mxu0
  %717 = vdwg.mxu0
  %v718 = vadd.f32 %v220, %v715
  %v719 = vxor.u32 %v718, 2147483648
  %v720 = vmul.f32 %v719, 1.442695
  %v721 = vpow.pop %v720
  %v722 = vadd.f32 %v721, 1.0
  %v723 = vrcp.pop %v722
  %v724 = vmul.f32 1.0, %v723
  %v725 = vtanh.pop %v718
  %v727 = vrot.slane %v635, 6
  %v729 = vmul.f32 %v724, %v727
  %731 = vrot.lane.b32.xlu0 %v725, 64
  %v732 = vpop.permute.xlu0 %731
  %v734 = vmul.f32 %v724, %v732
  %736 = vrot.lane.b32.xlu0 %v734, 32
  %v737 = vpop.permute.xlu0 %736
  %v739 = vadd.f32 %v729, %v737
  %v740 = vtanh.pop %v739
  %742 = vrot.lane.b32.xlu0 %v740, 64
  %v743 = vpop.permute.xlu0 %742
  %v745 = vmul.f32 %v724, %v743
  %747 = vrot.lane.b32.xlu0 %v745, 32
  %v748 = vpop.permute.xlu0 %747
  %v749 = vsel %vm223, %v748, 0
  %751 = vmatprep.subr.mxu0 0.0
  %752 = vmatpush1.msra.mxu0 0.0
  %753 = vmatprep.subr.mxu0 0.0
  %754 = vmatpush1.msra.mxu0 0.0
  %755 = vmatprep.subr.mxu0 0.0
  %756 = vmatpush1.msra.mxu0 0.0
  %757 = vmatprep.subr.mxu0 0.0
  %758 = vmatpush1.msra.mxu0 0.0
  %759 = vmatprep.subr.mxu0 0.0
  %760 = vmatpush1.msra.mxu0 0.0
  %761 = vmatprep.subr.mxu0 0.0
  %762 = vmatpush1.msra.mxu0 0.0
  %763 = vmatprep.subr.mxu0 0.0
  %764 = vmatpush1.msra.mxu0 0.0
  %765 = vmatprep.subr.mxu0 0.0
  %766 = vmatpush1.msra.mxu0 0.0
  %767 = vmatprep.subr.mxu0 0.0
  %768 = vmatpush1.msra.mxu0 0.0
  %769 = vmatprep.subr.mxu0 0.0
  %770 = vmatpush1.msra.mxu0 0.0
  %771 = vmatprep.subr.mxu0 0.0
  %772 = vmatpush1.msra.mxu0 0.0
  %773 = vmatprep.subr.mxu0 0.0
  %774 = vmatpush1.msra.mxu0 0.0
  %775 = vmatprep.subr.mxu0 0.0
  %776 = vmatpush1.msra.mxu0 %v38
  %777 = vmatprep.subr.mxu0 0.0
  %778 = vmatpush1.msra.mxu0 %v37
  %779 = vmatprep.subr.mxu0 0.0
  %780 = vmatpush1.msra.mxu0 %v36
  %781 = vmatprep.subr.mxu0 0.0
  %782 = vmatpush1.msra.mxu0 %v35
  %783 = vmatprep.subr.mxu0 0.0
  %784 = vmatpush2.msra.mxu0 0.0
  %785 = vmatprep.subr.mxu0 0.0
  %786 = vmatpush2.msra.mxu0 0.0
  %787 = vmatprep.subr.mxu0 0.0
  %788 = vmatpush2.msra.mxu0 0.0
  %789 = vmatprep.subr.mxu0 0.0
  %790 = vmatpush2.msra.mxu0 0.0
  %791 = vmatprep.subr.mxu0 0.0
  %792 = vmatpush2.msra.mxu0 0.0
  %793 = vmatprep.subr.mxu0 0.0
  %794 = vmatpush2.msra.mxu0 0.0
  %795 = vmatprep.subr.mxu0 0.0
  %796 = vmatpush2.msra.mxu0 0.0
  %797 = vmatprep.subr.mxu0 0.0
  %798 = vmatpush2.msra.mxu0 0.0
  %799 = vmatprep.subr.mxu0 0.0
  %800 = vmatpush2.msra.mxu0 0.0
  %801 = vmatprep.subr.mxu0 0.0
  %802 = vmatpush2.msra.mxu0 0.0
  %803 = vmatprep.subr.mxu0 0.0
  %804 = vmatpush2.msra.mxu0 0.0
  %805 = vmatprep.subr.mxu0 0.0
  %806 = vmatpush2.msra.mxu0 0.0
  %807 = vmatprep.subr.mxu0 0.0
  %808 = vmatpush2.msra.mxu0 0.0
  %809 = vmatprep.subr.mxu0 0.0
  %810 = vmatpush2.msra.mxu0 0.0
  %811 = vmatprep.subr.mxu0 0.0
  %812 = vmatpush2.msra.mxu0 0.0
  %813 = vmatprep.subr.mxu0 0.0
  %814 = vmatpush2.msra.mxu0 0.0
  %815 = vmatprep.mubr.f32.mxu0 0.0
  %816 = vmatmul.mubr.f32.gmra.mxu0 %v749
  %v817 = vpop.f32.mrf.mxu0
  %v818 = vadd.f32 0.0, %v817
  %v819 = vpop.f32.mrf.mxu0
  %820 = vdwg.mxu0
  %v822 = vrot.slane %v818, 6
  %v824 = vadd.f32 %v220, %v822
  %v825 = vxor.u32 %v824, 2147483648
  %v826 = vmul.f32 %v825, 1.442695
  %v827 = vpow.pop %v826
  %v828 = vadd.f32 %v827, 1.0
  %v829 = vrcp.pop %v828
  %v830 = vmul.f32 1.0, %v829
  %v831 = vtanh.pop %v824
  %v833 = vrot.slane %v739, 6
  %v835 = vmul.f32 %v830, %v833
  %837 = vrot.lane.b32.xlu0 %v831, 64
  %v838 = vpop.permute.xlu0 %837
  %v840 = vmul.f32 %v830, %v838
  %842 = vrot.lane.b32.xlu0 %v840, 32
  %v843 = vpop.permute.xlu0 %842
  %v845 = vadd.f32 %v835, %v843
  %v846 = vtanh.pop %v845
  %848 = vrot.lane.b32.xlu0 %v846, 64
  %v849 = vpop.permute.xlu0 %848
  %v851 = vmul.f32 %v830, %v849
  %v853 = vrot.slane %v851, 2
  %854 = vrot.lane.b32.xlu0 %v853, 32
  %v855 = vpop.permute.xlu0 %854
  %v856 = vsel %vm223, %v855, 0
  %858 = vmatprep.subr.mxu0 0.0
  %859 = vmatpush1.msra.mxu0 0.0
  %860 = vmatprep.subr.mxu0 0.0
  %861 = vmatpush1.msra.mxu0 0.0
  %862 = vmatprep.subr.mxu0 0.0
  %863 = vmatpush1.msra.mxu0 0.0
  %864 = vmatprep.subr.mxu0 0.0
  %865 = vmatpush1.msra.mxu0 0.0
  %866 = vmatprep.subr.mxu0 0.0
  %867 = vmatpush1.msra.mxu0 0.0
  %868 = vmatprep.subr.mxu0 0.0
  %869 = vmatpush1.msra.mxu0 0.0
  %870 = vmatprep.subr.mxu0 0.0
  %871 = vmatpush1.msra.mxu0 0.0
  %872 = vmatprep.subr.mxu0 0.0
  %873 = vmatpush1.msra.mxu0 0.0
  %874 = vmatprep.subr.mxu0 0.0
  %875 = vmatpush1.msra.mxu0 0.0
  %876 = vmatprep.subr.mxu0 0.0
  %877 = vmatpush1.msra.mxu0 0.0
  %878 = vmatprep.subr.mxu0 0.0
  %879 = vmatpush1.msra.mxu0 0.0
  %880 = vmatprep.subr.mxu0 0.0
  %881 = vmatpush1.msra.mxu0 0.0
  %882 = vmatprep.subr.mxu0 0.0
  %883 = vmatpush1.msra.mxu0 %v38
  %884 = vmatprep.subr.mxu0 0.0
  %885 = vmatpush1.msra.mxu0 %v37
  %886 = vmatprep.subr.mxu0 0.0
  %887 = vmatpush1.msra.mxu0 %v36
  %888 = vmatprep.subr.mxu0 0.0
  %889 = vmatpush1.msra.mxu0 %v35
  %890 = vmatprep.subr.mxu0 0.0
  %891 = vmatpush2.msra.mxu0 0.0
  %892 = vmatprep.subr.mxu0 0.0
  %893 = vmatpush2.msra.mxu0 0.0
  %894 = vmatprep.subr.mxu0 0.0
  %895 = vmatpush2.msra.mxu0 0.0
  %896 = vmatprep.subr.mxu0 0.0
  %897 = vmatpush2.msra.mxu0 0.0
  %898 = vmatprep.subr.mxu0 0.0
  %899 = vmatpush2.msra.mxu0 0.0
  %900 = vmatprep.subr.mxu0 0.0
  %901 = vmatpush2.msra.mxu0 0.0
  %902 = vmatprep.subr.mxu0 0.0
  %903 = vmatpush2.msra.mxu0 0.0
  %904 = vmatprep.subr.mxu0 0.0
  %905 = vmatpush2.msra.mxu0 0.0
  %906 = vmatprep.subr.mxu0 0.0
  %907 = vmatpush2.msra.mxu0 0.0
  %908 = vmatprep.subr.mxu0 0.0
  %909 = vmatpush2.msra.mxu0 0.0
  %910 = vmatprep.subr.mxu0 0.0
  %911 = vmatpush2.msra.mxu0 0.0
  %912 = vmatprep.subr.mxu0 0.0
  %913 = vmatpush2.msra.mxu0 0.0
  %914 = vmatprep.subr.mxu0 0.0
  %915 = vmatpush2.msra.mxu0 0.0
  %916 = vmatprep.subr.mxu0 0.0
  %917 = vmatpush2.msra.mxu0 0.0
  %918 = vmatprep.subr.mxu0 0.0
  %919 = vmatpush2.msra.mxu0 0.0
  %920 = vmatprep.subr.mxu0 0.0
  %921 = vmatpush2.msra.mxu0 0.0
  %922 = vmatprep.mubr.f32.mxu0 0.0
  %923 = vmatmul.mubr.f32.gmra.mxu0 %v856
  %v924 = vpop.f32.mrf.mxu0
  %v925 = vadd.f32 0.0, %v924
  %v926 = vpop.f32.mrf.mxu0
  %927 = vdwg.mxu0
  %v929 = vrot.slane %v925, 4
  %v931 = vadd.f32 %v220, %v929
  %v932 = vxor.u32 %v931, 2147483648
  %v933 = vmul.f32 %v932, 1.442695
  %v934 = vpow.pop %v933
  %v935 = vadd.f32 %v934, 1.0
  %v936 = vrcp.pop %v935
  %v937 = vmul.f32 1.0, %v936
  %v938 = vtanh.pop %v931
  %v940 = vrot.slane %v845, 6
  %v942 = vmul.f32 %v937, %v940
  %944 = vrot.lane.b32.xlu0 %v938, 64
  %v945 = vpop.permute.xlu0 %944
  %v947 = vmul.f32 %v937, %v945
  %949 = vrot.lane.b32.xlu0 %v947, 32
  %v950 = vpop.permute.xlu0 %949
  %v952 = vadd.f32 %v942, %v950
  %v953 = vtanh.pop %v952
  %955 = vrot.lane.b32.xlu0 %v953, 64
  %v956 = vpop.permute.xlu0 %955
  %v958 = vmul.f32 %v937, %v956
  %v960 = vrot.slane %v958, 4
  %961 = vrot.lane.b32.xlu0 %v960, 32
  %v962 = vpop.permute.xlu0 %961
  %v963 = vsel %vm223, %v962, 0
  %965 = vmatprep.subr.mxu0 0.0
  %966 = vmatpush1.msra.mxu0 0.0
  %967 = vmatprep.subr.mxu0 0.0
  %968 = vmatpush1.msra.mxu0 0.0
  %969 = vmatprep.subr.mxu0 0.0
  %970 = vmatpush1.msra.mxu0 0.0
  %971 = vmatprep.subr.mxu0 0.0
  %972 = vmatpush1.msra.mxu0 0.0
  %973 = vmatprep.subr.mxu0 0.0
  %974 = vmatpush1.msra.mxu0 0.0
  %975 = vmatprep.subr.mxu0 0.0
  %976 = vmatpush1.msra.mxu0 0.0
  %977 = vmatprep.subr.mxu0 0.0
  %978 = vmatpush1.msra.mxu0 0.0
  %979 = vmatprep.subr.mxu0 0.0
  %980 = vmatpush1.msra.mxu0 0.0
  %981 = vmatprep.subr.mxu0 0.0
  %982 = vmatpush1.msra.mxu0 0.0
  %983 = vmatprep.subr.mxu0 0.0
  %984 = vmatpush1.msra.mxu0 0.0
  %985 = vmatprep.subr.mxu0 0.0
  %986 = vmatpush1.msra.mxu0 0.0
  %987 = vmatprep.subr.mxu0 0.0
  %988 = vmatpush1.msra.mxu0 0.0
  %989 = vmatprep.subr.mxu0 0.0
  %990 = vmatpush1.msra.mxu0 %v38
  %991 = vmatprep.subr.mxu0 0.0
  %992 = vmatpush1.msra.mxu0 %v37
  %993 = vmatprep.subr.mxu0 0.0
  %994 = vmatpush1.msra.mxu0 %v36
  %995 = vmatprep.subr.mxu0 0.0
  %996 = vmatpush1.msra.mxu0 %v35
  %997 = vmatprep.subr.mxu0 0.0
  %998 = vmatpush2.msra.mxu0 0.0
  %999 = vmatprep.subr.mxu0 0.0
  %1000 = vmatpush2.msra.mxu0 0.0
  %1001 = vmatprep.subr.mxu0 0.0
  %1002 = vmatpush2.msra.mxu0 0.0
  %1003 = vmatprep.subr.mxu0 0.0
  %1004 = vmatpush2.msra.mxu0 0.0
  %1005 = vmatprep.subr.mxu0 0.0
  %1006 = vmatpush2.msra.mxu0 0.0
  %1007 = vmatprep.subr.mxu0 0.0
  %1008 = vmatpush2.msra.mxu0 0.0
  %1009 = vmatprep.subr.mxu0 0.0
  %1010 = vmatpush2.msra.mxu0 0.0
  %1011 = vmatprep.subr.mxu0 0.0
  %1012 = vmatpush2.msra.mxu0 0.0
  %1013 = vmatprep.subr.mxu0 0.0
  %1014 = vmatpush2.msra.mxu0 0.0
  %1015 = vmatprep.subr.mxu0 0.0
  %1016 = vmatpush2.msra.mxu0 0.0
  %1017 = vmatprep.subr.mxu0 0.0
  %1018 = vmatpush2.msra.mxu0 0.0
  %1019 = vmatprep.subr.mxu0 0.0
  %1020 = vmatpush2.msra.mxu0 0.0
  %1021 = vmatprep.subr.mxu0 0.0
  %1022 = vmatpush2.msra.mxu0 0.0
  %1023 = vmatprep.subr.mxu0 0.0
  %1024 = vmatpush2.msra.mxu0 0.0
  %1025 = vmatprep.subr.mxu0 0.0
  %1026 = vmatpush2.msra.mxu0 0.0
  %1027 = vmatprep.subr.mxu0 0.0
  %1028 = vmatpush2.msra.mxu0 0.0
  %1029 = vmatprep.mubr.f32.mxu0 0.0
  %1030 = vmatmul.mubr.f32.gmra.mxu0 %v963
  %v1031 = vpop.f32.mrf.mxu0
  %v1032 = vadd.f32 0.0, %v1031
  %v1033 = vpop.f32.mrf.mxu0
  %1034 = vdwg.mxu0
  %v1036 = vrot.slane %v1032, 2
  %v1038 = vadd.f32 %v220, %v1036
  %v1039 = vxor.u32 %v1038, 2147483648
  %v1040 = vmul.f32 %v1039, 1.442695
  %v1041 = vpow.pop %v1040
  %v1042 = vadd.f32 %v1041, 1.0
  %v1043 = vrcp.pop %v1042
  %v1044 = vmul.f32 1.0, %v1043
  %v1045 = vtanh.pop %v1038
  %v1047 = vrot.slane %v952, 6
  %v1049 = vmul.f32 %v1044, %v1047
  %1051 = vrot.lane.b32.xlu0 %v1045, 64
  %v1052 = vpop.permute.xlu0 %1051
  %v1054 = vmul.f32 %v1044, %v1052
  %1056 = vrot.lane.b32.xlu0 %v1054, 32
  %v1057 = vpop.permute.xlu0 %1056
  %v1059 = vadd.f32 %v1049, %v1057
  %v1060 = vtanh.pop %v1059
  %1062 = vrot.lane.b32.xlu0 %v1060, 64
  %v1063 = vpop.permute.xlu0 %1062
  %v1065 = vmul.f32 %v1044, %v1063
  %v1066 = vsel %vm56, %v321, %v427
  %vm1067 = vcmask 1043456
  %v1068 = vsel %vm1067, %v1066, %v534
  %vm1069 = vcmask 1045504
  %v1070 = vsel %vm1069, %v1068, %v641
  %v1071 = vsel %vm56, %v745, %v851
  %v1072 = vsel %vm1067, %v1071, %v958
  %v1073 = vsel %vm1069, %v1072, %v1065
  %v1075 = vlaneseq
  %v1076 = vshrl.u32 %v1075, 7
  %v1077 = vsub.s32 0, %v1076
  %v1078 = vrot.slane %v44, %v1077
  %1082 = vrot.lane.b32.xlu0 %v1070, 32
  %v1083 = vpop.permute.xlu0 %1082
  %1084 = vrot.lane.b32.xlu0 %v1073, 32
  %v1085 = vpop.permute.xlu0 %1084
  %v1086 = vsel %vm223, %v1083, 0
  %v1088 = vsel %vm223, %v1085, 0
  %1090 = vmatprep.subr.mxu0 0.0
  %1091 = vmatpush1.msra.mxu0 0.0
  %1092 = vmatprep.subr.mxu0 0.0
  %1093 = vmatpush1.msra.mxu0 0.0
  %1094 = vmatprep.subr.mxu0 0.0
  %1095 = vmatpush1.msra.mxu0 0.0
  %1096 = vmatprep.subr.mxu0 0.0
  %1097 = vmatpush1.msra.mxu0 0.0
  %1098 = vmatprep.subr.mxu0 0.0
  %1099 = vmatpush1.msra.mxu0 0.0
  %1100 = vmatprep.subr.mxu0 0.0
  %1101 = vmatpush1.msra.mxu0 0.0
  %1102 = vmatprep.subr.mxu0 0.0
  %1103 = vmatpush1.msra.mxu0 0.0
  %1104 = vmatprep.subr.mxu0 0.0
  %1105 = vmatpush1.msra.mxu0 0.0
  %1106 = vmatprep.subr.mxu0 0.0
  %1107 = vmatpush1.msra.mxu0 0.0
  %1108 = vmatprep.subr.mxu0 0.0
  %1109 = vmatpush1.msra.mxu0 0.0
  %1110 = vmatprep.subr.mxu0 0.0
  %1111 = vmatpush1.msra.mxu0 0.0
  %1112 = vmatprep.subr.mxu0 0.0
  %1113 = vmatpush1.msra.mxu0 0.0
  %1114 = vmatprep.subr.mxu0 0.0
  %1115 = vmatpush1.msra.mxu0 %v43
  %1116 = vmatprep.subr.mxu0 0.0
  %1117 = vmatpush1.msra.mxu0 %v42
  %1118 = vmatprep.subr.mxu0 0.0
  %1119 = vmatpush1.msra.mxu0 %v41
  %1120 = vmatprep.subr.mxu0 0.0
  %1121 = vmatpush1.msra.mxu0 %v40
  %1122 = vmatprep.subr.mxu0 0.0
  %1123 = vmatpush2.msra.mxu0 0.0
  %1124 = vmatprep.subr.mxu0 0.0
  %1125 = vmatpush2.msra.mxu0 0.0
  %1126 = vmatprep.subr.mxu0 0.0
  %1127 = vmatpush2.msra.mxu0 0.0
  %1128 = vmatprep.subr.mxu0 0.0
  %1129 = vmatpush2.msra.mxu0 0.0
  %1130 = vmatprep.subr.mxu0 0.0
  %1131 = vmatpush2.msra.mxu0 0.0
  %1132 = vmatprep.subr.mxu0 0.0
  %1133 = vmatpush2.msra.mxu0 0.0
  %1134 = vmatprep.subr.mxu0 0.0
  %1135 = vmatpush2.msra.mxu0 0.0
  %1136 = vmatprep.subr.mxu0 0.0
  %1137 = vmatpush2.msra.mxu0 0.0
  %1138 = vmatprep.subr.mxu0 0.0
  %1139 = vmatpush2.msra.mxu0 0.0
  %1140 = vmatprep.subr.mxu0 0.0
  %1141 = vmatpush2.msra.mxu0 0.0
  %1142 = vmatprep.subr.mxu0 0.0
  %1143 = vmatpush2.msra.mxu0 0.0
  %1144 = vmatprep.subr.mxu0 0.0
  %1145 = vmatpush2.msra.mxu0 0.0
  %1146 = vmatprep.subr.mxu0 0.0
  %1147 = vmatpush2.msra.mxu0 0.0
  %1148 = vmatprep.subr.mxu0 0.0
  %1149 = vmatpush2.msra.mxu0 0.0
  %1150 = vmatprep.subr.mxu0 0.0
  %1151 = vmatpush2.msra.mxu0 0.0
  %1152 = vmatprep.subr.mxu0 0.0
  %1153 = vmatpush2.msra.mxu0 0.0
  %1154 = vmatprep.mubr.f32.mxu0 0.0
  %1155 = vmatmul.mubr.f32.gmra.mxu0 %v1086
  %v1156 = vpop.f32.mrf.mxu0
  %v1157 = vadd.f32 %v1078, %v1156
  %v1158 = vpop.f32.mrf.mxu0
  %1159 = vmatprep.mubr.f32.mxu0 0.0
  %1160 = vmatmul.mubr.f32.gmra.mxu0 %v1088
  %v1161 = vpop.f32.mrf.mxu0
  %v1162 = vadd.f32 %v1078, %v1161
  %v1163 = vpop.f32.mrf.mxu0
  %1164 = vdwg.mxu0
  %1165 = vst.msk [vmem:[%s9] sm:$0xff] %vm52, %v1157
  %1166 = vst.msk [vmem:[%s9 + $0x8] sm:$0xff] %vm52, %v1162
  // Predicated region
  $region38: #{tpu_custom_call.1} parent=0 // pred_check
    _
  $region39: #{tpu_custom_call.1} parent=0 // pred_check_branch
    %1168 = sbr.rel (0) target = $region41
  $region40: #{tpu_custom_call.1} parent=0 // pred_region
    _
  $region41: #{tpu_custom_call.1} parent=0 // pred_fallthru
    _
  // Predicated region
  $region42: #{tpu_custom_call.1} parent=0 // pred_check
    _
  $region43: #{tpu_custom_call.1} parent=0 // pred_check_branch
    %1170 = sbr.rel (0) target = $region45
  $region44: #{tpu_custom_call.1} parent=0 // pred_region
    _
  $region45: #{tpu_custom_call.1} parent=0 // pred_fallthru
    _

</llo_original>
